<compile_context>
chip_gen: v7x
topology: tpu7x:2x2x1
jax: 0.10.0
libtpu: 0.0.40
codegen_flags: <defaults>
</compile_context>

<pallas_src>
import math
import jax
import jax.numpy as jnp
from jax.experimental import pallas as pl
from jax.experimental.pallas import tpu as pltpu


def _round_up(x, m):
    return (x + m - 1) // m * m


def _sublane_multiple(dtype):
    # Native sublane packing: f32 -> 8, bf16 -> 16, int8/fp8 -> 32.
    return max(8, 32 // jnp.dtype(dtype).itemsize)


# ----------------------------- kernels ------------------------------------- #

def _linear_kernel_acc(x_ref, w_ref, b_ref, o_ref, acc_ref):
    """K-tiled matmul with a VMEM f32 accumulator (grid = (M, N, K))."""
    k = pl.program_id(2)

    @pl.when(k == 0)
    def _():
        acc_ref[...] = jnp.zeros_like(acc_ref)

    acc_ref[...] += jnp.dot(
        x_ref[...], w_ref[...], preferred_element_type=jnp.float32
    )

    @pl.when(k == pl.num_programs(2) - 1)
    def _():
        # Bias added once per output tile, in f32, then cast to output dtype.
        o_ref[...] = (acc_ref[...] + b_ref[...]).astype(o_ref.dtype)


def _linear_kernel_single_k(x_ref, w_ref, b_ref, o_ref):
    """Whole K fits one tile: no scratch accumulator needed (grid = (M, N))."""
    o_ref[...] = (
        jnp.dot(x_ref[...], w_ref[...], preferred_element_type=jnp.float32)
        + b_ref[...]
    ).astype(o_ref.dtype)


# --------------------------- init (one-time) -------------------------------- #

def init_linear_params(weight, bias, *, tn=512, tk=512, compute_dtype=None):
    """One-time layout work: transpose + pad weight/bias to MXU-friendly tiles.

    weight: (D_out, D_in)  -- nn.Linear layout
    bias:   (D_out,)
    compute_dtype: e.g. jnp.bfloat16 to halve HBM traffic (f32 accumulation
                   is kept inside the kernel). None -> keep weight dtype.
    """
    D_out, D_in = weight.shape

    TN = min(tn, _round_up(D_out, 128))
    TK = min(tk, _round_up(D_in, 128))
    Np = _round_up(D_out, TN)
    Kp = _round_up(D_in, TK)

    w_t = weight.T                                   # (D_in, D_out)
    if compute_dtype is not None:
        w_t = w_t.astype(compute_dtype)
    if (Kp, Np) != (D_in, D_out):
        w_t = jnp.pad(w_t, ((0, Kp - D_in), (0, Np - D_out)))

    b2d = bias.astype(jnp.float32).reshape(1, D_out)
    if Np != D_out:
        b2d = jnp.pad(b2d, ((0, 0), (0, Np - D_out)))

    return dict(
        w_t=w_t, b2d=b2d, TN=TN, TK=TK,
        D_in=D_in, D_out=D_out, compute_dtype=compute_dtype,
    )


# ------------------------------ forward ------------------------------------ #

def linear_forward(x, params, *, tm=1024):
    """Computes x @ W^T + b using the pre-laid-out params from init_linear_params.

    x: (B, D_in)
    """
    w_t, b2d = params["w_t"], params["b2d"]
    TN, TK = params["TN"], params["TK"]
    D_in, D_out = params["D_in"], params["D_out"]

    B, D_in_x = x.shape
    assert D_in_x == D_in, "weight / input feature mismatch"

    cd = params["compute_dtype"]
    if cd is not None and x.dtype != cd:
        x = x.astype(cd)

    Kp, Np = w_t.shape
    itemsize = jnp.dtype(x.dtype).itemsize
    sub = _sublane_multiple(x.dtype)

    TM = min(tm, _round_up(B, sub))
    # Guarantee >=2 parallel output blocks when possible so v7x's second
    # TensorCore gets work even when D_out fits a single N tile.
    if Np // TN == 1 and B > sub:
        TM = min(TM, _round_up(-(-B // 2), sub))
    Mp = _round_up(B, TM)

    # Only x padding remains in the per-call path (shape-dependent). Padded K
    # rows contribute 0 to the accumulation; padded M rows are sliced off.
    if (Mp, Kp) != (B, D_in):
        x = jnp.pad(x, ((0, Mp - B), (0, Kp - D_in)))

    grid_k = Kp // TK
    cost = pl.CostEstimate(
        flops=2 * Mp * Np * Kp,
        transcendentals=0,
        bytes_accessed=(Mp * Kp + Kp * Np + Mp * Np) * itemsize + Np * 4,
    )

    if grid_k == 1:
        # Single-K fast path: no scratch accumulator, no init/finalize gating.
        out = pl.pallas_call(
            _linear_kernel_single_k,
            out_shape=jax.ShapeDtypeStruct((Mp, Np), x.dtype),
            grid=(Mp // TM, Np // TN),
            in_specs=[
                pl.BlockSpec((TM, TK), lambda m, n: (m, 0)),   # x tile
                pl.BlockSpec((TK, TN), lambda m, n: (0, n)),   # w_t tile
                pl.BlockSpec((1, TN), lambda m, n: (0, n)),    # bias tile (f32)
            ],
            out_specs=pl.BlockSpec((TM, TN), lambda m, n: (m, n)),
            compiler_params=pltpu.CompilerParams(
                dimension_semantics=("parallel", "parallel")
            ),
            cost_estimate=cost,
        )(x, w_t, b2d)
    else:
        out = pl.pallas_call(
            _linear_kernel_acc,
            out_shape=jax.ShapeDtypeStruct((Mp, Np), x.dtype),
            grid=(Mp // TM, Np // TN, grid_k),
            in_specs=[
                pl.BlockSpec((TM, TK), lambda m, n, k: (m, k)),   # x tile
                pl.BlockSpec((TK, TN), lambda m, n, k: (k, n)),   # w_t tile
                pl.BlockSpec((1, TN), lambda m, n, k: (0, n)),    # bias tile (f32)
            ],
            out_specs=pl.BlockSpec((TM, TN), lambda m, n, k: (m, n)),
            scratch_shapes=[pltpu.VMEM((TM, TN), jnp.float32)],
            compiler_params=pltpu.CompilerParams(
                dimension_semantics=("parallel", "parallel", "arbitrary")
            ),
            cost_estimate=cost,
        )(x, w_t, b2d)

    if (Mp, Np) != (B, D_out):
        out = out[:B, :D_out]
    return out


# ------------------------------- demo --------------------------------------- #

if __name__ == "__main__":
    key = jax.random.PRNGKey(0)

    # --- Case 1: small shapes from the module (batch=8, dim_in=32, dim_out=16);
    #             exercises the single-K fast path.
    B, D_in, D_out = 8, 32, 16
    kx, kw, kb, key = *jax.random.split(key, 3), jax.random.fold_in(key, 1)

    bound = 1.0 / math.sqrt(D_in)
    weight = jax.random.uniform(kw, (D_out, D_in), jnp.float32, -bound, bound)
    bias = jax.random.uniform(kb, (D_out,), jnp.float32, -bound, bound)
    x = jax.random.normal(kx, (B, D_in), jnp.float32)

    params = init_linear_params(weight, bias)        # one-time layout work
    out = jax.block_until_ready(linear_forward(x, params))

    ref = x @ weight.T + bias
    assert out.shape == (B, D_out)
    assert jnp.allclose(out, ref, atol=1e-5, rtol=1e-5), "case1 mismatch vs reference"

    # --- Case 2: multi-K accumulator path + M split for the second TensorCore
    #             (tk forced small so K is tiled).
    B2, D_in2, D_out2 = 16, 256, 192
    kx2, kw2, kb2 = jax.random.split(key, 3)
    bound2 = 1.0 / math.sqrt(D_in2)
    weight2 = jax.random.uniform(kw2, (D_out2, D_in2), jnp.float32, -bound2, bound2)
    bias2 = jax.random.uniform(kb2, (D_out2,), jnp.float32, -bound2, bound2)
    x2 = jax.random.normal(kx2, (B2, D_in2), jnp.float32)

    params2 = init_linear_params(weight2, bias2, tk=128)
    out2 = jax.block_until_ready(linear_forward(x2, params2))

    ref2 = x2 @ weight2.T + bias2
    assert out2.shape == (B2, D_out2)
    assert jnp.allclose(out2, ref2, atol=1e-5, rtol=1e-5), "case2 mismatch vs reference"

    print("KERNEL_OK")
</pallas_src>

<mosaic_0001>
module attributes {stable_mosaic.version = 11 : i64} {
  func.func @_linear_kernel_single_k(%arg0: i32, %arg1: i32, %arg2: memref<8x128xf32, #tpu.memory_space<vmem>>, %arg3: memref<128x128xf32, #tpu.memory_space<vmem>>, %arg4: memref<1x128xf32, #tpu.memory_space<vmem>>, %arg5: memref<8x128xf32, #tpu.memory_space<vmem>>) attributes {dimension_semantics = [#tpu.dimension_semantics<parallel>, #tpu.dimension_semantics<parallel>], iteration_bounds = array<i64: 1, 1>, scalar_prefetch = 0 : i64, scratch_operands = 0 : i64, tpu.core_type = #tpu.core_type<tc>, window_params = [{transform_indices = @transform_0, window_bounds = array<i64: 8, 128>}, {transform_indices = @transform_1, window_bounds = array<i64: 128, 128>}, {transform_indices = @transform_2, window_bounds = array<i64: 1, 128>}, {transform_indices = @transform_3, window_bounds = array<i64: 8, 128>}]} {
    %c0 = arith.constant 0 : index
    %c0_0 = arith.constant 0 : index
    %0 = vector.load %arg2[%c0, %c0_0] : memref<8x128xf32, #tpu.memory_space<vmem>>, vector<8x128xf32>
    %c0_1 = arith.constant 0 : index
    %c0_2 = arith.constant 0 : index
    %1 = vector.load %arg3[%c0_1, %c0_2] : memref<128x128xf32, #tpu.memory_space<vmem>>, vector<128x128xf32>
    %cst = arith.constant dense<0.000000e+00> : vector<8x128xf32>
    %2 = tpu.matmul %0, %1, %cst {dimension_numbers = #tpu.dot_dimension_numbers<[1], [0], [0], [1], [0, 0, 1, 1], [], []>} : vector<8x128xf32>, vector<128x128xf32>, vector<8x128xf32> -> vector<8x128xf32>
    %c0_3 = arith.constant 0 : index
    %c0_4 = arith.constant 0 : index
    %3 = vector.load %arg4[%c0_3, %c0_4] : memref<1x128xf32, #tpu.memory_space<vmem>>, vector<1x128xf32>
    %4 = vector.broadcast %3 : vector<1x128xf32> to vector<8x128xf32>
    %5 = arith.addf %2, %4 : vector<8x128xf32>
    %c0_5 = arith.constant 0 : index
    %c0_6 = arith.constant 0 : index
    %6 = vector.load %arg5[%c0_5, %c0_6] : memref<8x128xf32, #tpu.memory_space<vmem>>, vector<8x128xf32>
    tpu.vector_store %arg5[%c0_5, %c0_6], %5 {strides = array<i32>} : memref<8x128xf32, #tpu.memory_space<vmem>>, vector<8x128xf32>,
    return
  }
  func.func @transform_0(%arg0: i32, %arg1: i32) -> (i32, i32) {
    %c0_i32 = arith.constant 0 : i32
    %c0_i32_0 = arith.constant 0 : i32
    return %arg0, %c0_i32 : i32, i32
  }
  func.func @transform_1(%arg0: i32, %arg1: i32) -> (i32, i32) {
    %c0_i32 = arith.constant 0 : i32
    %c0_i32_0 = arith.constant 0 : i32
    return %c0_i32, %arg1 : i32, i32
  }
  func.func @transform_2(%arg0: i32, %arg1: i32) -> (i32, i32) {
    %c0_i32 = arith.constant 0 : i32
    %c0_i32_0 = arith.constant 0 : i32
    return %c0_i32, %arg1 : i32, i32
  }
  func.func @transform_3(%arg0: i32, %arg1: i32) -> (i32, i32) {
    %c0_i32 = arith.constant 0 : i32
    return %arg0, %arg1 : i32, i32
  }
}

</mosaic_0001>

<llo_original>
// kernel: tpu_custom_call.1
$region0: #{tpu_custom_call.1}
  #allocation0 [shape = 'u32[]', space=smem, size = 0x4, offset = 0x4, fixed_abs, tag = 'smem constant byte address 0x4 - core index']
  #allocation1 [shape = 'u32[144,128]{1,0:T(1,128)}', space=vmem, size = 0x12000, scoped, tag = 'internal scratch']
  %s0 = inlined_call_operand.hbm [shape: f32[8,128], index: 0, kind: input, shape index: {}]
  %s1 = inlined_call_operand.hbm [shape: f32[128,128], index: 1, kind: input, shape index: {}]
  %s2 = inlined_call_operand.vmem [shape: f32[1,128], index: 2, kind: input, shape index: {}]
  %s3 = inlined_call_operand.hbm [shape: f32[8,128], index: 3, kind: output, shape index: {}]
  %s4 = sld [smem:[#allocation0]]
  $region30: #{tpu_custom_call.1} parent=0
    _
  %s6 = ssub.s32 1, %s4
  %s7 = scalar_select 0, %s6, %s4
  $region1: #{tpu_custom_call.1} parent=0
    #allocation2 [shape = 'u8[4096]{0}', space=vmem, size = 0x1000, scoped, tag = 'input window, operand 0, single buffered']
    #allocation3 [shape = 's32[1]{0}', space=sflag, size = 0x4, scoped, tag = 'scoped memory for tpu_custom_call.1']
    #allocation4 [shape = 's32[1]{0}', space=sflag, size = 0x4, scoped, tag = 'scoped memory for tpu_custom_call.1']
    #allocation5 [shape = 'u8[65536]{0}', space=vmem, size = 0x10000, scoped, tag = 'input window, operand 1, single buffered']
    #allocation6 [shape = 's32[1]{0}', space=sflag, size = 0x4, scoped, tag = 'scoped memory for tpu_custom_call.1']
    #allocation7 [shape = 'u8[4096]{0}', space=vmem, size = 0x1000, scoped, tag = 'output window, operand 0, single buffered']
    %8 = vsyncpa [#allocation3], 0
    %9 = vsyncpa [#allocation6], 0
    %10 = vsyncpa [#allocation4], 0
    // Predicated region
    $region2: #{tpu_custom_call.1} parent=1 // pred_check
      _
    $region3: #{tpu_custom_call.1} parent=1 // pred_check_branch
      %12 = sbr.rel (0) target = $region5
    $region4: #{tpu_custom_call.1} parent=1 // pred_region
      %s14 = ssub.s32 128, 128
      %15 = vsyncadd [#allocation3], %s14
      %s17 = sshll.u32 [#allocation2], 4
      %s18 = int_to_ptr.vmem [resolvable:$true] %s17
      %20 = dma.hbm_to_vmem [thread:$0]  %s0, 128, %s18, [#allocation3]
    $region5: #{tpu_custom_call.1} parent=1 // pred_fallthru
      _
    // Predicated region
    $region6: #{tpu_custom_call.1} parent=1 // pred_check
      _
    $region7: #{tpu_custom_call.1} parent=1 // pred_check_branch
      %22 = sbr.rel (0) target = $region9
    $region8: #{tpu_custom_call.1} parent=1 // pred_region
      %s24 = ssub.s32 2048, 2048
      %25 = vsyncadd [#allocation6], %s24
      %s26 = sshll.u32 [#allocation5], 4
      %s27 = int_to_ptr.vmem [resolvable:$true] %s26
      %32 = dma.hbm_to_vmem [thread:$0]  %s1, 2048, %s27, [#allocation6], 128, 128, 8
    $region9: #{tpu_custom_call.1} parent=1 // pred_fallthru
      _
    // Predicated region
    $region10: #{tpu_custom_call.1} parent=1 // pred_check
      _
    $region11: #{tpu_custom_call.1} parent=1 // pred_check_branch
      %34 = sbr.rel (0) target = $region13
    $region12: #{tpu_custom_call.1} parent=1 // pred_region
      _
    $region13: #{tpu_custom_call.1} parent=1 // pred_fallthru
      _
    // Predicated region
    $region14: #{tpu_custom_call.1} parent=1 // pred_check
      _
    $region15: #{tpu_custom_call.1} parent=1 // pred_check_branch
      %36 = sbr.rel (0) target = $region17
    $region16: #{tpu_custom_call.1} parent=1 // pred_region
      %37 = dma.done [#allocation3], 128
    $region17: #{tpu_custom_call.1} parent=1 // pred_fallthru
      _
    // Predicated region
    $region18: #{tpu_custom_call.1} parent=1 // pred_check
      _
    $region19: #{tpu_custom_call.1} parent=1 // pred_check_branch
      %39 = sbr.rel (0) target = $region21
    $region20: #{tpu_custom_call.1} parent=1 // pred_region
      %40 = dma.done [#allocation6], 2048
    $region21: #{tpu_custom_call.1} parent=1 // pred_fallthru
      _
    %v41 = vld [vmem:[#allocation2] sm:$0xff]
    %v42 = vld [vmem:[#allocation5] sm:$0xff]
    %v43 = vld [vmem:[#allocation5 + $0x8] sm:$0xff]
    %v44 = vld [vmem:[#allocation5 + $0x10] sm:$0xff]
    %v45 = vld [vmem:[#allocation5 + $0x18] sm:$0xff]
    %v46 = vld [vmem:[#allocation5 + $0x20] sm:$0xff]
    %v47 = vld [vmem:[#allocation5 + $0x28] sm:$0xff]
    %v48 = vld [vmem:[#allocation5 + $0x30] sm:$0xff]
    %v49 = vld [vmem:[#allocation5 + $0x38] sm:$0xff]
    %v50 = vld [vmem:[#allocation5 + $0x40] sm:$0xff]
    %v51 = vld [vmem:[#allocation5 + $0x48] sm:$0xff]
    %v52 = vld [vmem:[#allocation5 + $0x50] sm:$0xff]
    %v53 = vld [vmem:[#allocation5 + $0x58] sm:$0xff]
    %v54 = vld [vmem:[#allocation5 + $0x60] sm:$0xff]
    %v55 = vld [vmem:[#allocation5 + $0x68] sm:$0xff]
    %v56 = vld [vmem:[#allocation5 + $0x70] sm:$0xff]
    %v57 = vld [vmem:[#allocation5 + $0x78] sm:$0xff]
    %v58 = vld [vmem:[%s2] sm:$0x1]
    %v60 = vlaneseq
    %v61 = vshrl.u32 %v60, 7
    %v62 = vsub.s32 0, %v61
    %v63 = vrot.slane %v58, %v62
    %65 = vmatprep.subr.mxu0 0.0
    %66 = vmatpush1.msra.mxu0 %v42
    %67 = vmatprep.subr.mxu0 0.0
    %68 = vmatpush1.msra.mxu0 %v43
    %69 = vmatprep.subr.mxu0 0.0
    %70 = vmatpush1.msra.mxu0 %v44
    %71 = vmatprep.subr.mxu0 0.0
    %72 = vmatpush1.msra.mxu0 %v45
    %73 = vmatprep.subr.mxu0 0.0
    %74 = vmatpush1.msra.mxu0 %v46
    %75 = vmatprep.subr.mxu0 0.0
    %76 = vmatpush1.msra.mxu0 %v47
    %77 = vmatprep.subr.mxu0 0.0
    %78 = vmatpush1.msra.mxu0 %v48
    %79 = vmatprep.subr.mxu0 0.0
    %80 = vmatpush1.msra.mxu0 %v49
    %81 = vmatprep.subr.mxu0 0.0
    %82 = vmatpush1.msra.mxu0 %v50
    %83 = vmatprep.subr.mxu0 0.0
    %84 = vmatpush1.msra.mxu0 %v51
    %85 = vmatprep.subr.mxu0 0.0
    %86 = vmatpush1.msra.mxu0 %v52
    %87 = vmatprep.subr.mxu0 0.0
    %88 = vmatpush1.msra.mxu0 %v53
    %89 = vmatprep.subr.mxu0 0.0
    %90 = vmatpush1.msra.mxu0 %v54
    %91 = vmatprep.subr.mxu0 0.0
    %92 = vmatpush1.msra.mxu0 %v55
    %93 = vmatprep.subr.mxu0 0.0
    %94 = vmatpush1.msra.mxu0 %v56
    %95 = vmatprep.subr.mxu0 0.0
    %96 = vmatpush1.msra.mxu0 %v57
    %97 = vmatprep.subr.mxu0 0.0
    %98 = vmatpush1.msra.mxu0 0.0
    %99 = vmatprep.subr.mxu0 0.0
    %100 = vmatpush1.msra.mxu0 0.0
    %101 = vmatprep.subr.mxu0 0.0
    %102 = vmatpush1.msra.mxu0 0.0
    %103 = vmatprep.subr.mxu0 0.0
    %104 = vmatpush1.msra.mxu0 0.0
    %105 = vmatprep.subr.mxu0 0.0
    %106 = vmatpush1.msra.mxu0 0.0
    %107 = vmatprep.subr.mxu0 0.0
    %108 = vmatpush1.msra.mxu0 0.0
    %109 = vmatprep.subr.mxu0 0.0
    %110 = vmatpush1.msra.mxu0 0.0
    %111 = vmatprep.subr.mxu0 0.0
    %112 = vmatpush1.msra.mxu0 0.0
    %113 = vmatprep.subr.mxu0 0.0
    %114 = vmatpush1.msra.mxu0 0.0
    %115 = vmatprep.subr.mxu0 0.0
    %116 = vmatpush1.msra.mxu0 0.0
    %117 = vmatprep.subr.mxu0 0.0
    %118 = vmatpush1.msra.mxu0 0.0
    %119 = vmatprep.subr.mxu0 0.0
    %120 = vmatpush1.msra.mxu0 0.0
    %121 = vmatprep.subr.mxu0 0.0
    %122 = vmatpush1.msra.mxu0 0.0
    %123 = vmatprep.subr.mxu0 0.0
    %124 = vmatpush1.msra.mxu0 0.0
    %125 = vmatprep.subr.mxu0 0.0
    %126 = vmatpush1.msra.mxu0 0.0
    %127 = vmatprep.subr.mxu0 0.0
    %128 = vmatpush1.msra.mxu0 0.0
    %129 = vmatprep.mubr.f32.mxu0 0.0
    %130 = vmatmul.mubr.f32.gmra.mrb[0].mxu0 %v41
    %v131 = vpop.f32.mrb[0].mxu0
    %v132 = vadd.f32 %v63, %v131
    %v133 = vpop.f32.mrb[0].mxu0
    %134 = vdwg.mxu0
    %135 = vst [vmem:[#allocation7] sm:$0xff] %v132
    // Predicated region
    $region22: #{tpu_custom_call.1} parent=1 // pred_check
      _
    $region23: #{tpu_custom_call.1} parent=1 // pred_check_branch
      %137 = sbr.rel (0) target = $region25
    $region24: #{tpu_custom_call.1} parent=1 // pred_region
      %s139 = ssub.s32 128, 128
      %140 = vsyncadd [#allocation4], %s139
      %s142 = sshll.u32 [#allocation7], 4
      %s143 = int_to_ptr.vmem [resolvable:$true] %s142
      %145 = dma.vmem_to_hbm [thread:$0]  %s143, 128, %s3, [#allocation4]
    $region25: #{tpu_custom_call.1} parent=1 // pred_fallthru
      _
    // Predicated region
    $region26: #{tpu_custom_call.1} parent=1 // pred_check
      _
    $region27: #{tpu_custom_call.1} parent=1 // pred_check_branch
      %147 = sbr.rel (0) target = $region29
    $region28: #{tpu_custom_call.1} parent=1 // pred_region
      %148 = dma.done [#allocation4], 128
    $region29: #{tpu_custom_call.1} parent=1 // pred_fallthru
      _
    %149 = vsyncpa [#allocation3], 1
    %150 = vsyncpa [#allocation6], 1
    %151 = vsyncpa [#allocation4], 1

</llo_original>
